<compile_context>
chip_gen: v6e
topology: v6e:2x2x1
jax: 0.10.0
libtpu: 0.0.40
codegen_flags: <defaults>
</compile_context>

<pallas_src>
import numpy as np
import jax
import jax.numpy as jnp
from jax.experimental import pallas as pl
from jax.experimental.pallas import tpu as pltpu

_BODY_WEIGHT = 76.3869        # constant baked into the torch module
_EPS = 1e-8                   # relative-error eps (matches torch code)

_TORQUE_TILE_ROWS = 1024      # 1024*128 samples / tile  (~3 MiB of input / step)
_GRF_TILE_ROWS = 96           # 96*128 (b,t) samples / tile x C contacts (~3.5 MiB / step)

# Abramowitz & Stegun 4.4.46 coefficients (arccos(x) = sqrt(1-x)*poly(x), x in [0,1])
_ACOS_COEF = (1.5707963050, -0.2145988016, 0.0889789874, -0.0501743046,
              0.0308918810, -0.0170881256, 0.0066700901, -0.0012624911)


def _cdiv(a, b):
    return (a + b - 1) // b


def _round_up(a, b):
    return _cdiv(a, b) * b


# --------------------------- in-kernel helpers ------------------------------
def _arccos(x):
    """arccos on [-1, 1]; Mosaic has no acos lowering, so use A&S 4.4.46."""
    ax = jnp.abs(x)
    p = _ACOS_COEF[7]
    for c in (_ACOS_COEF[6], _ACOS_COEF[5], _ACOS_COEF[4], _ACOS_COEF[3],
              _ACOS_COEF[2], _ACOS_COEF[1], _ACOS_COEF[0]):
        p = p * ax + c
    r = jnp.sqrt(jnp.maximum(1.0 - ax, 0.0)) * p
    return jnp.where(x >= 0.0, r, jnp.float32(np.pi) - r)


def _fast_recip(x):
    """EUP approximate reciprocal + one Newton step (~1e-7 rel error).

    Cheaper than a full f32 divide (which lowers to reciprocal + multiple
    refinement/fixup VALU ops); used only on the relative-error metrics.
    """
    r = pl.reciprocal(x, approx=True)
    return r * (2.0 - x * r)


def _lane_partial(x):
    """Reduce slab dims + sublanes only -> (1, 128) per-lane partial sum.

    The final cross-lane (XLU) reduction is deferred to the wrapper.
    """
    while x.ndim > 2:
        x = jnp.sum(x, axis=0)          # slab dims: pure VALU adds
    return jnp.sum(x, axis=0, keepdims=True)   # sublane reduce only


# ------------------------------- kernels ------------------------------------
def _torque_kernel(tb_ref, to_ref, out_ref):
    # tb_ref / to_ref : (3, TR, 128) ; out_ref : (8, 128) per-lane partial sums
    tb0, tb1, tb2 = tb_ref[0], tb_ref[1], tb_ref[2]
    to0, to1, to2 = to_ref[0], to_ref[1], to_ref[2]

    ssb = tb0 * tb0 + tb1 * tb1 + tb2 * tb2
    sso = to0 * to0 + to1 * to1 + to2 * to2
    dot = tb0 * to0 + tb1 * to1 + tb2 * to2
    nb = jnp.sqrt(ssb)
    no = jnp.sqrt(sso)
    prod = nb * no

    cos = dot / jnp.maximum(prod, 1e-12)      # exact divide: feeds arccos
    cos = jnp.where(prod == 0.0, 1.0, cos)    # ang_cos[mask] = 1
    cos = jnp.clip(cos, -1.0, 1.0)
    ang = _arccos(cos)

    mag_dis = jnp.abs(nb - no)
    mag_tor = jnp.where(nb == 0.0, mag_dis, nb)
    mag_rel = mag_dis * _fast_recip(mag_tor + _EPS)

    d0 = tb0 - to0
    d1 = tb1 - to1
    d2 = tb2 - to2
    dis = jnp.sqrt(d0 * d0 + d1 * d1 + d2 * d2)
    tor = jnp.where(nb == 0.0, dis, nb)
    rel = dis * _fast_recip(tor + _EPS)

    # one metric per sublane; cross-lane sum is done in the wrapper
    out_ref[0:1, :] = _lane_partial(dis)
    out_ref[1:2, :] = _lane_partial(rel)
    out_ref[2:3, :] = _lane_partial(mag_dis)
    out_ref[3:4, :] = _lane_partial(mag_rel)
    out_ref[4:5, :] = _lane_partial(ang)
    out_ref[5:8, :] = jnp.zeros((3, 128), jnp.float32)


def _grf_kernel(gb_ref, go_ref, out_ref):
    # gb_ref / go_ref : (3, C, TRG, 128) ; out_ref : (8, 128)
    # TODO(synk): the optional 'contact' gating branch of MSE_grf is not wired
    # (the synthetic output dict has no 'contact' head).
    gb0, gb1, gb2 = gb_ref[0], gb_ref[1], gb_ref[2]
    go0, go1, go2 = go_ref[0], go_ref[1], go_ref[2]

    ssb = gb0 * gb0 + gb1 * gb1 + gb2 * gb2
    sso = go0 * go0 + go1 * go1 + go2 * go2
    dot = gb0 * go0 + gb1 * go1 + gb2 * go2
    nb = jnp.sqrt(ssb)
    no = jnp.sqrt(sso)
    prod = nb * no

    cos = dot / jnp.maximum(prod, 1e-12)
    cos = jnp.where(prod == 0.0, 1.0, cos)
    cos = jnp.clip(cos, -1.0, 1.0)
    ang = _arccos(cos)

    mag_dis = jnp.abs(nb - no)
    mag_grf = jnp.where(nb == 0.0, mag_dis, nb)
    mag_rel = jnp.minimum(mag_dis * _fast_recip(mag_grf + _EPS), 1.0)

    d0 = gb0 - go0
    d1 = gb1 - go1
    d2 = gb2 - go2
    dis = jnp.sqrt(d0 * d0 + d1 * d1 + d2 * d2)
    den = jnp.where(nb == 0.0, dis, nb)
    rel = jnp.minimum(dis * _fast_recip(den + _EPS), 1.0)

    # left / right foot: static contact-row slices (contacts 7+10 and 8+11)
    lf0, lf1, lf2 = d0[7] + d0[10], d1[7] + d1[10], d2[7] + d2[10]
    rf0, rf1, rf2 = d0[8] + d0[11], d1[8] + d1[11], d2[8] + d2[11]
    dis_lf = jnp.sqrt(lf0 * lf0 + lf1 * lf1 + lf2 * lf2)
    dis_rf = jnp.sqrt(rf0 * rf0 + rf1 * rf1 + rf2 * rf2)

    out_ref[0:1, :] = _lane_partial(dis)
    out_ref[1:2, :] = _lane_partial(rel)
    out_ref[2:3, :] = _lane_partial(mag_dis)
    out_ref[3:4, :] = _lane_partial(mag_rel)
    out_ref[4:5, :] = _lane_partial(ang)
    out_ref[5:6, :] = _lane_partial(dis_lf)
    out_ref[6:7, :] = _lane_partial(dis_rf)
    out_ref[7:8, :] = jnp.zeros((1, 128), jnp.float32)


# ------------------------------- wrapper -------------------------------------
def metric_layer_forward(batch, output, req=("MSE_torque", "MSE_grf")):
    """Forward pass of metricLayer for req = ('MSE_torque', 'MSE_grf')."""
    # TODO(synk): other req branches (L1_torque, L2_grf, mix_metric,
    # L1_pos_post, L1_rot_post) are not wired into this synthetic kernel.
    assert "MSE_torque" in req and "MSE_grf" in req

    b_tor = jnp.asarray(batch["torque"], jnp.float32)
    o_tor = jnp.asarray(output["torque"], jnp.float32)
    b_grf = jnp.asarray(batch["grf"], jnp.float32)
    o_grf = jnp.asarray(output["grf"], jnp.float32)

    B, T, J, V = b_tor.shape
    C = b_grf.shape[2]
    assert V == 3 and b_grf.shape[3] == 3 and C >= 12
    Rt, BT = B * T * J, B * T

    def cparams(n_inputs):
        return pltpu.CompilerParams(
            dimension_semantics=("parallel",),          # megacore-shard the tile grid
            vmem_limit_bytes=32 * 1024 * 1024,
            allow_input_fusion=[True] * n_inputs,       # let XLA fuse the relayout
        )

    # ----------------------- MSE_torque branch ------------------------------
    rows_t = _cdiv(Rt, 128)
    tr = min(_TORQUE_TILE_ROWS, _round_up(rows_t, 8))
    rows_t_pad = _round_up(rows_t, tr)
    pad_t = rows_t_pad * 128 - Rt
    # transpose + pad + reshape written as one fusable producer expression
    tb = jnp.pad(b_tor.reshape(Rt, 3).T, ((0, 0), (0, pad_t))).reshape(3, rows_t_pad, 128)
    to = jnp.pad(o_tor.reshape(Rt, 3).T, ((0, 0), (0, pad_t))).reshape(3, rows_t_pad, 128)
    n_t_tiles = rows_t_pad // tr
    n_t_elems = rows_t_pad * 128

    tor_cost = pl.CostEstimate(
        flops=64 * n_t_elems,
        transcendentals=6 * n_t_elems,
        bytes_accessed=2 * 3 * n_t_elems * 4 + n_t_tiles * 8 * 128 * 4,
    )
    tor_part = pl.pallas_call(
        _torque_kernel,
        out_shape=jax.ShapeDtypeStruct((n_t_tiles, 8, 128), jnp.float32),
        grid=(n_t_tiles,),
        in_specs=[pl.BlockSpec((3, tr, 128), lambda i: (0, i, 0)),
                  pl.BlockSpec((3, tr, 128), lambda i: (0, i, 0))],
        out_specs=pl.BlockSpec((None, 8, 128), lambda i: (i, 0, 0)),
        compiler_params=cparams(2),
        cost_estimate=tor_cost,
    )(tb, to)
    # finish the (tiny) reduction in the wrapper: sum tiles + lanes per sublane
    ts = jnp.sum(tor_part, axis=(0, 2))            # (8,); sublane m = metric m

    mse_t = ts[0] / Rt
    metrics = {
        "MSE_torque": mse_t,
        "RelMSE_torque": ts[1] / Rt,
        "MagErr_torque": ts[2] / Rt,
        "RelMagErr_torque": ts[3] / Rt,
        "Ang_torque": ts[4] / Rt,
        "tau": mse_t / (_BODY_WEIGHT * 60.0),
    }

    # ------------------------- MSE_grf branch -------------------------------
    rows_g = _cdiv(BT, 128)
    trg = min(_GRF_TILE_ROWS, _round_up(rows_g, 8))
    rows_g_pad = _round_up(rows_g, trg)
    pad_g = rows_g_pad * 128 - BT
    gb = jnp.pad(jnp.transpose(b_grf, (3, 2, 0, 1)).reshape(3, C, BT),
                 ((0, 0), (0, 0), (0, pad_g))).reshape(3, C, rows_g_pad, 128)
    go = jnp.pad(jnp.transpose(o_grf, (3, 2, 0, 1)).reshape(3, C, BT),
                 ((0, 0), (0, 0), (0, pad_g))).reshape(3, C, rows_g_pad, 128)
    n_g_tiles = rows_g_pad // trg
    n_g_elems = rows_g_pad * 128 * C

    grf_cost = pl.CostEstimate(
        flops=72 * n_g_elems,
        transcendentals=6 * n_g_elems,
        bytes_accessed=2 * 3 * n_g_elems * 4 + n_g_tiles * 8 * 128 * 4,
    )
    grf_part = pl.pallas_call(
        _grf_kernel,
        out_shape=jax.ShapeDtypeStruct((n_g_tiles, 8, 128), jnp.float32),
        grid=(n_g_tiles,),
        in_specs=[pl.BlockSpec((3, C, trg, 128), lambda i: (0, 0, i, 0)),
                  pl.BlockSpec((3, C, trg, 128), lambda i: (0, 0, i, 0))],
        out_specs=pl.BlockSpec((None, 8, 128), lambda i: (i, 0, 0)),
        compiler_params=cparams(2),
        cost_estimate=grf_cost,
    )(gb, go)
    gs = jnp.sum(grf_part, axis=(0, 2))            # (8,)

    mse_g = gs[0] / (BT * C)
    mse_lf = gs[5] / BT
    mse_rf = gs[6] / BT
    metrics.update({
        "MSE_grf_lf": mse_lf,
        "MSE_grf_rf": mse_rf,
        "MSE_grf": mse_g,
        "RelMSE_grf": gs[1] / (BT * C),
        "MagErr_grf": gs[2] / (BT * C),
        "RelMagErr_grf": gs[3] / (BT * C),
        "Ang_grf": gs[4] / (BT * C),
        "lamda": mse_g / _BODY_WEIGHT,
        "lamda_lf": mse_lf / _BODY_WEIGHT,
        "lamda_rf": mse_rf / _BODY_WEIGHT,
    })
    return metrics


# ------------------------ pure-JAX reference (mirrors the torch code) --------
def _reference_metrics(batch, output):
    b_tor, o_tor = batch["torque"], output["torque"]
    b_grf, o_grf = batch["grf"], output["grf"]

    def vnorm(x):
        return jnp.linalg.norm(x, axis=-1, keepdims=True)

    def normalize(x):
        return x / jnp.maximum(vnorm(x), 1e-12)

    def cos_sim(a, b):
        na = jnp.maximum(jnp.linalg.norm(a, axis=-1), 1e-8)
        nb = jnp.maximum(jnp.linalg.norm(b, axis=-1), 1e-8)
        return jnp.sum(a * b, axis=-1) / (na * nb)

    res = {}
    # MSE_torque
    bn, on = vnorm(b_tor), vnorm(o_tor)
    bv, ov = normalize(b_tor), normalize(o_tor)
    ang_cos = cos_sim(bv, ov)[..., None]
    ang_cos = jnp.where(bn * on == 0, 1.0, ang_cos)
    ang_err = jnp.arccos(jnp.clip(ang_cos, -1.0, 1.0))
    mag_dis = jnp.abs(bn - on)
    mag_tor = jnp.where(bn == 0, mag_dis, bn)
    mag_rel = mag_dis / (mag_tor + _EPS)
    dis = jnp.linalg.norm(b_tor - o_tor, axis=-1)[..., None]
    tor = jnp.where(bn == 0, dis, bn)
    rel = dis / (tor + _EPS)
    mse_t = dis.mean()
    res.update({"MSE_torque": mse_t, "RelMSE_torque": rel.mean(),
                "MagErr_torque": mag_dis.mean(), "RelMagErr_torque": mag_rel.mean(),
                "Ang_torque": ang_err.mean(), "tau": mse_t / (_BODY_WEIGHT * 60.0)})
    # MSE_grf
    bn, on = vnorm(b_grf), vnorm(o_grf)
    bv, ov = normalize(b_grf), normalize(o_grf)
    ang_cos = cos_sim(bv, ov)[..., None]
    ang_cos = jnp.where(bn * on == 0, 1.0, ang_cos)
    ang_err = jnp.arccos(jnp.clip(ang_cos, -1.0, 1.0))
    mag_dis = jnp.abs(bn - on)
    mag_grf = jnp.where(bn == 0, mag_dis, bn)
    mag_rel = jnp.minimum(mag_dis / (mag_grf + _EPS), 1.0)
    dis = jnp.linalg.norm(b_grf - o_grf, axis=-1)[..., None]
    grf = jnp.where(bn == 0, dis, bn)
    rel = jnp.minimum(dis / (grf + _EPS), 1.0)
    dis_f = (b_grf[:, :, [7, 8]] + b_grf[:, :, [10, 11]]
             - o_grf[:, :, [7, 8]] - o_grf[:, :, [10, 11]])
    dis_f = jnp.linalg.norm(dis_f, axis=-1)
    mse_g = dis.mean()
    mse_lf = dis_f[:, :, 0].mean()
    mse_rf = dis_f[:, :, 1].mean()
    res.update({"MSE_grf_lf": mse_lf, "MSE_grf_rf": mse_rf, "MSE_grf": mse_g,
                "RelMSE_grf": rel.mean(), "MagErr_grf": mag_dis.mean(),
                "RelMagErr_grf": mag_rel.mean(), "Ang_grf": ang_err.mean(),
                "lamda": mse_g / _BODY_WEIGHT, "lamda_lf": mse_lf / _BODY_WEIGHT,
                "lamda_rf": mse_rf / _BODY_WEIGHT})
    return res


if __name__ == "__main__":
    B, T, J, C = 2, 8, 16, 12
    key = jax.random.PRNGKey(0)
    k1, k2, k3, k4 = jax.random.split(key, 4)
    batch = {
        "torque": jax.random.normal(k1, (B, T, J, 3), jnp.float32),
        "grf": jax.random.normal(k3, (B, T, C, 3), jnp.float32),
    }
    output = {
        "torque": batch["torque"] + 0.1 * jax.random.normal(k2, (B, T, J, 3), jnp.float32),
        "grf": batch["grf"] + 0.1 * jax.random.normal(k4, (B, T, C, 3), jnp.float32),
    }

    metrics = metric_layer_forward(batch, output)
    metrics = jax.tree_util.tree_map(jax.block_until_ready, metrics)

    ref = _reference_metrics(batch, output)
    for name, ref_val in ref.items():
        np.testing.assert_allclose(np.asarray(metrics[name]), np.asarray(ref_val),
                                   rtol=1e-4, atol=1e-5, err_msg=name)
    print("KERNEL_OK")
</pallas_src>

<mosaic_0001>
module attributes {stable_mosaic.version = 11 : i64} {
  func.func @_torque_kernel(%arg0: i32, %arg1: memref<3x8x128xf32, #tpu.memory_space<vmem>>, %arg2: memref<3x8x128xf32, #tpu.memory_space<vmem>>, %arg3: memref<1x8x128xf32, #tpu.memory_space<vmem>>) attributes {dimension_semantics = [#tpu.dimension_semantics<parallel>], iteration_bounds = array<i64: 1>, scalar_prefetch = 0 : i64, scratch_operands = 0 : i64, tpu.core_type = #tpu.core_type<tc>, window_params = [{transform_indices = @transform_0, window_bounds = array<i64: 3, 8, 128>}, {transform_indices = @transform_1, window_bounds = array<i64: 3, 8, 128>}, {transform_indices = @transform_2, window_bounds = array<i64: 1, 8, 128>}]} {
    %c0 = arith.constant 0 : index
    %c0_0 = arith.constant 0 : index
    %c0_1 = arith.constant 0 : index
    %0 = vector.load %arg1[%c0, %c0_0, %c0_1] : memref<3x8x128xf32, #tpu.memory_space<vmem>>, vector<1x8x128xf32>
    %1 = vector.shape_cast %0 : vector<1x8x128xf32> to vector<8x128xf32>
    %c1 = arith.constant 1 : index
    %c0_2 = arith.constant 0 : index
    %c0_3 = arith.constant 0 : index
    %2 = vector.load %arg1[%c1, %c0_2, %c0_3] : memref<3x8x128xf32, #tpu.memory_space<vmem>>, vector<1x8x128xf32>
    %3 = vector.shape_cast %2 : vector<1x8x128xf32> to vector<8x128xf32>
    %c2 = arith.constant 2 : index
    %c0_4 = arith.constant 0 : index
    %c0_5 = arith.constant 0 : index
    %4 = vector.load %arg1[%c2, %c0_4, %c0_5] : memref<3x8x128xf32, #tpu.memory_space<vmem>>, vector<1x8x128xf32>
    %5 = vector.shape_cast %4 : vector<1x8x128xf32> to vector<8x128xf32>
    %c0_6 = arith.constant 0 : index
    %c0_7 = arith.constant 0 : index
    %c0_8 = arith.constant 0 : index
    %6 = vector.load %arg2[%c0_6, %c0_7, %c0_8] : memref<3x8x128xf32, #tpu.memory_space<vmem>>, vector<1x8x128xf32>
    %7 = vector.shape_cast %6 : vector<1x8x128xf32> to vector<8x128xf32>
    %c1_9 = arith.constant 1 : index
    %c0_10 = arith.constant 0 : index
    %c0_11 = arith.constant 0 : index
    %8 = vector.load %arg2[%c1_9, %c0_10, %c0_11] : memref<3x8x128xf32, #tpu.memory_space<vmem>>, vector<1x8x128xf32>
    %9 = vector.shape_cast %8 : vector<1x8x128xf32> to vector<8x128xf32>
    %c2_12 = arith.constant 2 : index
    %c0_13 = arith.constant 0 : index
    %c0_14 = arith.constant 0 : index
    %10 = vector.load %arg2[%c2_12, %c0_13, %c0_14] : memref<3x8x128xf32, #tpu.memory_space<vmem>>, vector<1x8x128xf32>
    %11 = vector.shape_cast %10 : vector<1x8x128xf32> to vector<8x128xf32>
    %12 = arith.mulf %1, %1 : vector<8x128xf32>
    %13 = arith.mulf %3, %3 : vector<8x128xf32>
    %14 = arith.addf %12, %13 : vector<8x128xf32>
    %15 = arith.mulf %5, %5 : vector<8x128xf32>
    %16 = arith.addf %14, %15 : vector<8x128xf32>
    %17 = arith.mulf %7, %7 : vector<8x128xf32>
    %18 = arith.mulf %9, %9 : vector<8x128xf32>
    %19 = arith.addf %17, %18 : vector<8x128xf32>
    %20 = arith.mulf %11, %11 : vector<8x128xf32>
    %21 = arith.addf %19, %20 : vector<8x128xf32>
    %22 = arith.mulf %1, %7 : vector<8x128xf32>
    %23 = arith.mulf %3, %9 : vector<8x128xf32>
    %24 = arith.addf %22, %23 : vector<8x128xf32>
    %25 = arith.mulf %5, %11 : vector<8x128xf32>
    %26 = arith.addf %24, %25 : vector<8x128xf32>
    %27 = math.sqrt %16 : vector<8x128xf32>
    %28 = math.sqrt %21 : vector<8x128xf32>
    %29 = arith.mulf %27, %28 : vector<8x128xf32>
    %cst = arith.constant 9.99999996E-13 : f32
    %30 = vector.broadcast %cst : f32 to vector<8x128xf32>
    %31 = arith.maximumf %29, %30 : vector<8x128xf32>
    %32 = arith.divf %26, %31 : vector<8x128xf32>
    %cst_15 = arith.constant 0.000000e+00 : f32
    %33 = vector.broadcast %cst_15 : f32 to vector<8x128xf32>
    %34 = arith.cmpf oeq, %29, %33 : vector<8x128xf32>
    %cst_16 = arith.constant 1.000000e+00 : f32
    %35 = vector.broadcast %cst_16 : f32 to vector<8x128xf32>
    %36 = arith.select %34, %35, %32 : vector<8x128xi1>, vector<8x128xf32>
    %cst_17 = arith.constant -1.000000e+00 : f32
    %cst_18 = arith.constant 1.000000e+00 : f32
    %37 = vector.broadcast %cst_17 : f32 to vector<8x128xf32>
    %38 = arith.maximumf %37, %36 : vector<8x128xf32>
    %39 = vector.broadcast %cst_18 : f32 to vector<8x128xf32>
    %40 = arith.minimumf %39, %38 : vector<8x128xf32>
    %41 = math.absf %40 : vector<8x128xf32>
    %cst_19 = arith.constant -0.0012624911 : f32
    %42 = vector.broadcast %cst_19 : f32 to vector<8x128xf32>
    %43 = arith.mulf %42, %41 : vector<8x128xf32>
    %cst_20 = arith.constant 6.670090e-03 : f32
    %44 = vector.broadcast %cst_20 : f32 to vector<8x128xf32>
    %45 = arith.addf %43, %44 : vector<8x128xf32>
    %46 = arith.mulf %45, %41 : vector<8x128xf32>
    %cst_21 = arith.constant -0.0170881264 : f32
    %47 = vector.broadcast %cst_21 : f32 to vector<8x128xf32>
    %48 = arith.addf %46, %47 : vector<8x128xf32>
    %49 = arith.mulf %48, %41 : vector<8x128xf32>
    %cst_22 = arith.constant 0.0308918804 : f32
    %50 = vector.broadcast %cst_22 : f32 to vector<8x128xf32>
    %51 = arith.addf %49, %50 : vector<8x128xf32>
    %52 = arith.mulf %51, %41 : vector<8x128xf32>
    %cst_23 = arith.constant -0.0501743034 : f32
    %53 = vector.broadcast %cst_23 : f32 to vector<8x128xf32>
    %54 = arith.addf %52, %53 : vector<8x128xf32>
    %55 = arith.mulf %54, %41 : vector<8x128xf32>
    %cst_24 = arith.constant 0.0889789909 : f32
    %56 = vector.broadcast %cst_24 : f32 to vector<8x128xf32>
    %57 = arith.addf %55, %56 : vector<8x128xf32>
    %58 = arith.mulf %57, %41 : vector<8x128xf32>
    %cst_25 = arith.constant -0.214598805 : f32
    %59 = vector.broadcast %cst_25 : f32 to vector<8x128xf32>
    %60 = arith.addf %58, %59 : vector<8x128xf32>
    %61 = arith.mulf %60, %41 : vector<8x128xf32>
    %cst_26 = arith.constant 1.57079625 : f32
    %62 = vector.broadcast %cst_26 : f32 to vector<8x128xf32>
    %63 = arith.addf %61, %62 : vector<8x128xf32>
    %cst_27 = arith.constant 1.000000e+00 : f32
    %64 = vector.broadcast %cst_27 : f32 to vector<8x128xf32>
    %65 = arith.subf %64, %41 : vector<8x128xf32>
    %cst_28 = arith.constant 0.000000e+00 : f32
    %66 = vector.broadcast %cst_28 : f32 to vector<8x128xf32>
    %67 = arith.maximumf %65, %66 : vector<8x128xf32>
    %68 = math.sqrt %67 : vector<8x128xf32>
    %69 = arith.mulf %68, %63 : vector<8x128xf32>
    %cst_29 = arith.constant 0.000000e+00 : f32
    %70 = vector.broadcast %cst_29 : f32 to vector<8x128xf32>
    %71 = arith.cmpf oge, %40, %70 : vector<8x128xf32>
    %cst_30 = arith.constant 3.14159274 : f32
    %72 = vector.broadcast %cst_30 : f32 to vector<8x128xf32>
    %73 = arith.subf %72, %69 : vector<8x128xf32>
    %74 = arith.select %71, %69, %73 : vector<8x128xi1>, vector<8x128xf32>
    %75 = arith.subf %27, %28 : vector<8x128xf32>
    %76 = math.absf %75 : vector<8x128xf32>
    %cst_31 = arith.constant 0.000000e+00 : f32
    %77 = vector.broadcast %cst_31 : f32 to vector<8x128xf32>
    %78 = arith.cmpf oeq, %27, %77 : vector<8x128xf32>
    %79 = arith.select %78, %76, %27 : vector<8x128xi1>, vector<8x128xf32>
    %cst_32 = arith.constant 9.99999993E-9 : f32
    %80 = vector.broadcast %cst_32 : f32 to vector<8x128xf32>
    %81 = arith.addf %79, %80 : vector<8x128xf32>
    %82 = tpu.reciprocal %81 {approx = true} : vector<8x128xf32> -> vector<8x128xf32>
    %83 = arith.mulf %81, %82 : vector<8x128xf32>
    %cst_33 = arith.constant 2.000000e+00 : f32
    %84 = vector.broadcast %cst_33 : f32 to vector<8x128xf32>
    %85 = arith.subf %84, %83 : vector<8x128xf32>
    %86 = arith.mulf %82, %85 : vector<8x128xf32>
    %87 = arith.mulf %76, %86 : vector<8x128xf32>
    %88 = arith.subf %1, %7 : vector<8x128xf32>
    %89 = arith.subf %3, %9 : vector<8x128xf32>
    %90 = arith.subf %5, %11 : vector<8x128xf32>
    %91 = arith.mulf %88, %88 : vector<8x128xf32>
    %92 = arith.mulf %89, %89 : vector<8x128xf32>
    %93 = arith.addf %91, %92 : vector<8x128xf32>
    %94 = arith.mulf %90, %90 : vector<8x128xf32>
    %95 = arith.addf %93, %94 : vector<8x128xf32>
    %96 = math.sqrt %95 : vector<8x128xf32>
    %cst_34 = arith.constant 0.000000e+00 : f32
    %97 = vector.broadcast %cst_34 : f32 to vector<8x128xf32>
    %98 = arith.cmpf oeq, %27, %97 : vector<8x128xf32>
    %99 = arith.select %98, %96, %27 : vector<8x128xi1>, vector<8x128xf32>
    %cst_35 = arith.constant 9.99999993E-9 : f32
    %100 = vector.broadcast %cst_35 : f32 to vector<8x128xf32>
    %101 = arith.addf %99, %100 : vector<8x128xf32>
    %102 = tpu.reciprocal %101 {approx = true} : vector<8x128xf32> -> vector<8x128xf32>
    %103 = arith.mulf %101, %102 : vector<8x128xf32>
    %cst_36 = arith.constant 2.000000e+00 : f32
    %104 = vector.broadcast %cst_36 : f32 to vector<8x128xf32>
    %105 = arith.subf %104, %103 : vector<8x128xf32>
    %106 = arith.mulf %102, %105 : vector<8x128xf32>
    %107 = arith.mulf %96, %106 : vector<8x128xf32>
    %cst_37 = arith.constant dense<0.000000e+00> : vector<128xf32>
    %108 = vector.multi_reduction <add>, %96, %cst_37 [0] : vector<8x128xf32> to vector<128xf32>
    %109 = vector.shape_cast %108 : vector<128xf32> to vector<1x128xf32>
    %c0_38 = arith.constant 0 : index
    %c0_39 = arith.constant 0 : index
    %c0_40 = arith.constant 0 : index
    %110 = vector.load %arg3[%c0_38, %c0_39, %c0_40] : memref<1x8x128xf32, #tpu.memory_space<vmem>>, vector<1x1x128xf32>
    %111 = vector.shape_cast %110 : vector<1x1x128xf32> to vector<1x128xf32>
    %112 = vector.shape_cast %109 : vector<1x128xf32> to vector<1x1x128xf32>
    tpu.vector_store %arg3[%c0_38, %c0_39, %c0_40], %112 {strides = array<i32>} : memref<1x8x128xf32, #tpu.memory_space<vmem>>, vector<1x1x128xf32>,
    %cst_41 = arith.constant dense<0.000000e+00> : vector<128xf32>
    %113 = vector.multi_reduction <add>, %107, %cst_41 [0] : vector<8x128xf32> to vector<128xf32>
    %114 = vector.shape_cast %113 : vector<128xf32> to vector<1x128xf32>
    %c0_42 = arith.constant 0 : index
    %c1_43 = arith.constant 1 : index
    %c0_44 = arith.constant 0 : index
    %115 = vector.load %arg3[%c0_42, %c1_43, %c0_44] : memref<1x8x128xf32, #tpu.memory_space<vmem>>, vector<1x1x128xf32>
    %116 = vector.shape_cast %115 : vector<1x1x128xf32> to vector<1x128xf32>
    %117 = vector.shape_cast %114 : vector<1x128xf32> to vector<1x1x128xf32>
    tpu.vector_store %arg3[%c0_42, %c1_43, %c0_44], %117 {strides = array<i32>} : memref<1x8x128xf32, #tpu.memory_space<vmem>>, vector<1x1x128xf32>,
    %cst_45 = arith.constant dense<0.000000e+00> : vector<128xf32>
    %118 = vector.multi_reduction <add>, %76, %cst_45 [0] : vector<8x128xf32> to vector<128xf32>
    %119 = vector.shape_cast %118 : vector<128xf32> to vector<1x128xf32>
    %c0_46 = arith.constant 0 : index
    %c2_47 = arith.constant 2 : index
    %c0_48 = arith.constant 0 : index
    %120 = vector.load %arg3[%c0_46, %c2_47, %c0_48] : memref<1x8x128xf32, #tpu.memory_space<vmem>>, vector<1x1x128xf32>
    %121 = vector.shape_cast %120 : vector<1x1x128xf32> to vector<1x128xf32>
    %122 = vector.shape_cast %119 : vector<1x128xf32> to vector<1x1x128xf32>
    tpu.vector_store %arg3[%c0_46, %c2_47, %c0_48], %122 {strides = array<i32>} : memref<1x8x128xf32, #tpu.memory_space<vmem>>, vector<1x1x128xf32>,
    %cst_49 = arith.constant dense<0.000000e+00> : vector<128xf32>
    %123 = vector.multi_reduction <add>, %87, %cst_49 [0] : vector<8x128xf32> to vector<128xf32>
    %124 = vector.shape_cast %123 : vector<128xf32> to vector<1x128xf32>
    %c0_50 = arith.constant 0 : index
    %c3 = arith.constant 3 : index
    %c0_51 = arith.constant 0 : index
    %125 = vector.load %arg3[%c0_50, %c3, %c0_51] : memref<1x8x128xf32, #tpu.memory_space<vmem>>, vector<1x1x128xf32>
    %126 = vector.shape_cast %125 : vector<1x1x128xf32> to vector<1x128xf32>
    %127 = vector.shape_cast %124 : vector<1x128xf32> to vector<1x1x128xf32>
    tpu.vector_store %arg3[%c0_50, %c3, %c0_51], %127 {strides = array<i32>} : memref<1x8x128xf32, #tpu.memory_space<vmem>>, vector<1x1x128xf32>,
    %cst_52 = arith.constant dense<0.000000e+00> : vector<128xf32>
    %128 = vector.multi_reduction <add>, %74, %cst_52 [0] : vector<8x128xf32> to vector<128xf32>
    %129 = vector.shape_cast %128 : vector<128xf32> to vector<1x128xf32>
    %c0_53 = arith.constant 0 : index
    %c4 = arith.constant 4 : index
    %c0_54 = arith.constant 0 : index
    %130 = vector.load %arg3[%c0_53, %c4, %c0_54] : memref<1x8x128xf32, #tpu.memory_space<vmem>>, vector<1x1x128xf32>
    %131 = vector.shape_cast %130 : vector<1x1x128xf32> to vector<1x128xf32>
    %132 = vector.shape_cast %129 : vector<1x128xf32> to vector<1x1x128xf32>
    tpu.vector_store %arg3[%c0_53, %c4, %c0_54], %132 {strides = array<i32>} : memref<1x8x128xf32, #tpu.memory_space<vmem>>, vector<1x1x128xf32>,
    %cst_55 = arith.constant 0.000000e+00 : f32
    %133 = vector.broadcast %cst_55 : f32 to vector<3x128xf32>
    %c0_56 = arith.constant 0 : index
    %c5 = arith.constant 5 : index
    %c0_57 = arith.constant 0 : index
    %134 = vector.load %arg3[%c0_56, %c5, %c0_57] : memref<1x8x128xf32, #tpu.memory_space<vmem>>, vector<1x3x128xf32>
    %135 = vector.shape_cast %134 : vector<1x3x128xf32> to vector<3x128xf32>
    %136 = vector.shape_cast %133 : vector<3x128xf32> to vector<1x3x128xf32>
    tpu.vector_store %arg3[%c0_56, %c5, %c0_57], %136 {strides = array<i32>} : memref<1x8x128xf32, #tpu.memory_space<vmem>>, vector<1x3x128xf32>,
    return
  }
  func.func @transform_0(%arg0: i32) -> (i32, i32, i32) {
    %c0_i32 = arith.constant 0 : i32
    %c0_i32_0 = arith.constant 0 : i32
    %c0_i32_1 = arith.constant 0 : i32
    return %c0_i32, %arg0, %c0_i32_0 : i32, i32, i32
  }
  func.func @transform_1(%arg0: i32) -> (i32, i32, i32) {
    %c0_i32 = arith.constant 0 : i32
    %c0_i32_0 = arith.constant 0 : i32
    %c0_i32_1 = arith.constant 0 : i32
    return %c0_i32, %arg0, %c0_i32_0 : i32, i32, i32
  }
  func.func @transform_2(%arg0: i32) -> (i32, i32, i32) {
    %c0_i32 = arith.constant 0 : i32
    %c0_i32_0 = arith.constant 0 : i32
    %c0_i32_1 = arith.constant 0 : i32
    return %arg0, %c0_i32, %c0_i32_0 : i32, i32, i32
  }
}

</mosaic_0001>

<llo_original>
// kernel: tpu_custom_call.1
$region0: #{tpu_custom_call.1}
  #allocation0 [shape = 'u32[]', space=smem, size = 0x4, offset = 0x4, fixed_abs, tag = 'smem constant byte address 0x4 - core index']
  #allocation1 [shape = 'u32[144,128]{1,0:T(1,128)}', space=vmem, size = 0x12000, scoped, tag = 'internal scratch']
  %s0 = inlined_call_operand.hbm [shape: f32[3,8,128], index: 0, kind: input, shape index: {}]
  %s1 = inlined_call_operand.hbm [shape: f32[3,8,128], index: 1, kind: input, shape index: {}]
  %s2 = inlined_call_operand.hbm [shape: f32[1,8,128], index: 2, kind: output, shape index: {}]
  %s3 = sld [smem:[#allocation0]]
  $region26: #{tpu_custom_call.1} parent=0
    _
  %s5 = ssub.s32 1, %s3
  %s6 = scalar_select 0, %s5, %s3
  $region1: #{tpu_custom_call.1} parent=0
    #allocation2 [shape = 'u8[12288]{0}', space=vmem, size = 0x3000, scoped, tag = 'input window, operand 0, single buffered']
    #allocation3 [shape = 's32[1]{0}', space=sflag, size = 0x4, scoped, tag = 'scoped memory for tpu_custom_call.1']
    #allocation4 [shape = 's32[1]{0}', space=sflag, size = 0x4, scoped, tag = 'scoped memory for tpu_custom_call.1']
    #allocation5 [shape = 'u8[12288]{0}', space=vmem, size = 0x3000, scoped, tag = 'input window, operand 1, single buffered']
    #allocation6 [shape = 's32[1]{0}', space=sflag, size = 0x4, scoped, tag = 'scoped memory for tpu_custom_call.1']
    #allocation7 [shape = 'u8[4096]{0}', space=vmem, size = 0x1000, scoped, tag = 'output window, operand 0, single buffered']
    %7 = vsyncpa [#allocation3], 0
    %8 = vsyncpa [#allocation6], 0
    %9 = vsyncpa [#allocation4], 0
    // Predicated region
    $region2: #{tpu_custom_call.1} parent=1 // pred_check
      _
    $region3: #{tpu_custom_call.1} parent=1 // pred_check_branch
      %11 = sbr.rel (0) target = $region5
    $region4: #{tpu_custom_call.1} parent=1 // pred_region
      %s13 = ssub.s32 384, 384
      %14 = vsyncadd [#allocation3], %s13
      %s15 = sshll.u32 [#allocation2], 4
      %s16 = int_to_ptr.vmem [resolvable:$true] %s15
      %21 = dma.hbm_to_vmem [thread:$0]  %s0, 384, %s16, [#allocation3], 128, 128, 8
    $region5: #{tpu_custom_call.1} parent=1 // pred_fallthru
      _
    // Predicated region
    $region6: #{tpu_custom_call.1} parent=1 // pred_check
      _
    $region7: #{tpu_custom_call.1} parent=1 // pred_check_branch
      %23 = sbr.rel (0) target = $region9
    $region8: #{tpu_custom_call.1} parent=1 // pred_region
      %s25 = ssub.s32 384, 384
      %26 = vsyncadd [#allocation6], %s25
      %s27 = sshll.u32 [#allocation5], 4
      %s28 = int_to_ptr.vmem [resolvable:$true] %s27
      %33 = dma.hbm_to_vmem [thread:$0]  %s1, 384, %s28, [#allocation6], 128, 128, 8
    $region9: #{tpu_custom_call.1} parent=1 // pred_fallthru
      _
    // Predicated region
    $region10: #{tpu_custom_call.1} parent=1 // pred_check
      _
    $region11: #{tpu_custom_call.1} parent=1 // pred_check_branch
      %35 = sbr.rel (0) target = $region13
    $region12: #{tpu_custom_call.1} parent=1 // pred_region
      %36 = dma.done [#allocation3], 384
    $region13: #{tpu_custom_call.1} parent=1 // pred_fallthru
      _
    // Predicated region
    $region14: #{tpu_custom_call.1} parent=1 // pred_check
      _
    $region15: #{tpu_custom_call.1} parent=1 // pred_check_branch
      %38 = sbr.rel (0) target = $region17
    $region16: #{tpu_custom_call.1} parent=1 // pred_region
      %39 = dma.done [#allocation6], 384
    $region17: #{tpu_custom_call.1} parent=1 // pred_fallthru
      _
    %v40 = vld [vmem:[#allocation2] sm:$0xff]
    %s41 = scalar_lea.vmem [#allocation2], 8
    %v42 = vld [vmem:[%s41] sm:$0xff]
    %s43 = scalar_lea.vmem [#allocation2], 16
    %v44 = vld [vmem:[%s43] sm:$0xff]
    %v45 = vld [vmem:[#allocation5] sm:$0xff]
    %s46 = scalar_lea.vmem [#allocation5], 8
    %v47 = vld [vmem:[%s46] sm:$0xff]
    %s48 = scalar_lea.vmem [#allocation5], 16
    %v49 = vld [vmem:[%s48] sm:$0xff]
    %v50 = vmul.f32 %v40, %v40
    %v51 = vmul.f32 %v42, %v42
    %v52 = vadd.f32 %v50, %v51
    %v53 = vmul.f32 %v44, %v44
    %v54 = vadd.f32 %v52, %v53
    %v55 = vmul.f32 %v45, %v45
    %v56 = vmul.f32 %v47, %v47
    %v57 = vadd.f32 %v55, %v56
    %v58 = vmul.f32 %v49, %v49
    %v59 = vadd.f32 %v57, %v58
    %v60 = vmul.f32 %v40, %v45
    %v61 = vmul.f32 %v42, %v47
    %v62 = vadd.f32 %v60, %v61
    %v63 = vmul.f32 %v44, %v49
    %v64 = vadd.f32 %v62, %v63
    %v65 = vrsqrt.pop %v54
    %v66 = vmul.f32 %v54, %v65
    %vm67 = vcmp.eq.f32.partialorder %v54, inf
    %v68 = vsel %vm67, %v54, %v66
    %vm69 = vcmp.eq.f32.partialorder %v54, 0.0
    %v70 = vand.u32 %v54, 2147483648
    %v71 = vsel %vm69, %v70, %v68
    %v72 = vrsqrt.pop %v59
    %v73 = vmul.f32 %v59, %v72
    %vm74 = vcmp.eq.f32.partialorder %v59, inf
    %v75 = vsel %vm74, %v59, %v73
    %vm76 = vcmp.eq.f32.partialorder %v59, 0.0
    %v77 = vand.u32 %v59, 2147483648
    %v78 = vsel %vm76, %v77, %v75
    %v79 = vmul.f32 %v71, %v78
    %v80 = vmax.f32 %v79, 1e-12
    %v81 = vrcp.pop %v80
    %v82 = vmul.f32 %v64, %v81
    %vm83 = vcmp.eq.f32.partialorder %v79, 0.0
    %v84 = vsel %vm83, 1.0, %v82
    %v85 = vmax.f32 %v84, -1.0
    %v86 = vmin.f32 %v85, 1.0
    %v87 = vand.u32 2147483647, %v86
    %v88 = vmul.f32 %v87, -0.0012624911
    %v89 = vadd.f32 %v88, 0.00667009
    %v90 = vmul.f32 %v89, %v87
    %v91 = vadd.f32 %v90, -0.017088126
    %v92 = vmul.f32 %v91, %v87
    %v93 = vadd.f32 %v92, 0.03089188
    %v94 = vmul.f32 %v93, %v87
    %v95 = vadd.f32 %v94, -0.050174303
    %v96 = vmul.f32 %v95, %v87
    %v97 = vadd.f32 %v96, 0.08897899
    %v98 = vmul.f32 %v97, %v87
    %v99 = vadd.f32 %v98, -0.2145988
    %v100 = vmul.f32 %v99, %v87
    %v101 = vadd.f32 %v100, 1.5707963
    %v102 = vsub.f32 1.0, %v87
    %v103 = vmax.f32 %v102, 0.0
    %v104 = vrsqrt.pop %v103
    %v105 = vmul.f32 %v103, %v104
    %vm106 = vcmp.eq.f32.partialorder %v103, inf
    %v107 = vsel %vm106, %v103, %v105
    %vm108 = vcmp.eq.f32.partialorder %v103, 0.0
    %v109 = vand.u32 %v103, 2147483648
    %v110 = vsel %vm108, %v109, %v107
    %v111 = vmul.f32 %v110, %v101
    %vm112 = vcmp.ge.f32.partialorder %v86, 0.0
    %v113 = vsub.f32 3.1415927, %v111
    %v114 = vsel %vm112, %v111, %v113
    %v115 = vsub.f32 %v71, %v78
    %v116 = vand.u32 2147483647, %v115
    %vm117 = vcmp.eq.f32.partialorder %v71, 0.0
    %v118 = vsel %vm117, %v116, %v71
    %v119 = vadd.f32 %v118, 1e-08
    %v120 = vrcp.pop %v119
    %v121 = vmul.f32 %v119, %v120
    %v122 = vsub.f32 2.0, %v121
    %v123 = vmul.f32 %v120, %v122
    %v124 = vmul.f32 %v116, %v123
    %v125 = vsub.f32 %v40, %v45
    %v126 = vsub.f32 %v42, %v47
    %v127 = vsub.f32 %v44, %v49
    %v128 = vmul.f32 %v125, %v125
    %v129 = vmul.f32 %v126, %v126
    %v130 = vadd.f32 %v128, %v129
    %v131 = vmul.f32 %v127, %v127
    %v132 = vadd.f32 %v130, %v131
    %v133 = vrsqrt.pop %v132
    %v134 = vmul.f32 %v132, %v133
    %vm135 = vcmp.eq.f32.partialorder %v132, inf
    %v136 = vsel %vm135, %v132, %v134
    %vm137 = vcmp.eq.f32.partialorder %v132, 0.0
    %v138 = vand.u32 %v132, 2147483648
    %v139 = vsel %vm137, %v138, %v136
    %v140 = vsel %vm117, %v139, %v71
    %v141 = vadd.f32 %v140, 1e-08
    %v142 = vrcp.pop %v141
    %v143 = vmul.f32 %v141, %v142
    %v144 = vsub.f32 2.0, %v143
    %v145 = vmul.f32 %v142, %v144
    %v146 = vmul.f32 %v139, %v145
    %v147 = vrot.slane %v139, 4
    %v148 = vadd.f32 %v139, %v147
    %v149 = vrot.slane %v148, 2
    %v150 = vadd.f32 %v148, %v149
    %v151 = vrot.slane %v150, 1
    %v152 = vadd.f32 %v150, %v151
    %153 = vst [vmem:[#allocation7] sm:$0x1] %v152
    %v154 = vrot.slane %v146, 4
    %v155 = vadd.f32 %v146, %v154
    %v156 = vrot.slane %v155, 2
    %v157 = vadd.f32 %v155, %v156
    %v158 = vrot.slane %v157, 1
    %v159 = vadd.f32 %v157, %v158
    %160 = vst [vmem:[#allocation7 + $0x1] sm:$0x1] %v159
    %v161 = vrot.slane %v116, 4
    %v162 = vadd.f32 %v116, %v161
    %v163 = vrot.slane %v162, 2
    %v164 = vadd.f32 %v162, %v163
    %v165 = vrot.slane %v164, 1
    %v166 = vadd.f32 %v164, %v165
    %167 = vst [vmem:[#allocation7 + $0x2] sm:$0x1] %v166
    %v168 = vrot.slane %v124, 4
    %v169 = vadd.f32 %v124, %v168
    %v170 = vrot.slane %v169, 2
    %v171 = vadd.f32 %v169, %v170
    %v172 = vrot.slane %v171, 1
    %v173 = vadd.f32 %v171, %v172
    %174 = vst [vmem:[#allocation7 + $0x3] sm:$0x1] %v173
    %v175 = vrot.slane %v114, 4
    %v176 = vadd.f32 %v114, %v175
    %v177 = vrot.slane %v176, 2
    %v178 = vadd.f32 %v176, %v177
    %v179 = vrot.slane %v178, 1
    %v180 = vadd.f32 %v178, %v179
    %181 = vst [vmem:[#allocation7 + $0x4] sm:$0x1] %v180
    %182 = vst [vmem:[#allocation7 + $0x5] sm:$0x7] 0.0
    // Predicated region
    $region18: #{tpu_custom_call.1} parent=1 // pred_check
      _
    $region19: #{tpu_custom_call.1} parent=1 // pred_check_branch
      %184 = sbr.rel (0) target = $region21
    $region20: #{tpu_custom_call.1} parent=1 // pred_region
      %s186 = ssub.s32 128, 128
      %187 = vsyncadd [#allocation4], %s186
      %s189 = sshll.u32 [#allocation7], 4
      %s190 = int_to_ptr.vmem [resolvable:$true] %s189
      %192 = dma.vmem_to_hbm [thread:$0]  %s190, 128, %s2, [#allocation4]
    $region21: #{tpu_custom_call.1} parent=1 // pred_fallthru
      _
    // Predicated region
    $region22: #{tpu_custom_call.1} parent=1 // pred_check
      _
    $region23: #{tpu_custom_call.1} parent=1 // pred_check_branch
      %194 = sbr.rel (0) target = $region25
    $region24: #{tpu_custom_call.1} parent=1 // pred_region
      %195 = dma.done [#allocation4], 128
    $region25: #{tpu_custom_call.1} parent=1 // pred_fallthru
      _
    %196 = vsyncpa [#allocation3], 1
    %197 = vsyncpa [#allocation6], 1
    %198 = vsyncpa [#allocation4], 1

</llo_original>
